<compile_context>
chip_gen: v7x
topology: tpu7x:2x2x1
jax: 0.10.0
libtpu: 0.0.40
codegen_flags: <defaults>
</compile_context>

<pallas_src>
import functools

import jax
import jax.numpy as jnp
from jax.experimental import pallas as pl
from jax.experimental.pallas import tpu as pltpu


def _round_up(x, m):
    return (x + m - 1) // m * m


def _cdiv(a, b):
    return -(-a // b)


# ----------------------- shared: conv of one row tile (in VMEM) ------------------------ #
def _conv_tile(xc_ref, xh_ref, w_ref, *, img_w, ksize_h):
    # xc_ref: (1, TR, Ck_p)        fp32  current row tile (KW pre-folded into channels)
    # xh_ref: (1, HALO, Ck_p)      fp32  halo rows from the successor tile
    # w_ref:  (KH, Ck_p, Cpad)     bf16  one (KW*Cin, Cpad) weight slab per kh tap
    tr = xc_ref.shape[1]
    # Stitch window, cast to bf16 once (hoisted out of the tap loop).
    xw = jnp.concatenate([xc_ref[0], xh_ref[0]], axis=0).astype(jnp.bfloat16)
    acc = None
    for kh in range(ksize_h):
        off = kh * img_w                                            # static tap offset
        xs = xw[off:off + tr, :]                                    # (TR, Ck_p) bf16
        part = jnp.dot(xs, w_ref[kh], preferred_element_type=jnp.float32)   # MXU, fp32 acc
        acc = part if acc is None else acc + part
    return acc                                                      # (TR, Cpad) fp32


# -------------------- pass 1: stats only (masked sum / sum-of-squares) ----------------- #
def _stats_kernel(xc_ref, xh_ref, w_ref, mask_ref, sum_ref, sumsq_ref, *, img_w, ksize_h):
    # sum_ref / sumsq_ref: (1, 1, Cpad) fp32, per-batch resident accumulators.
    @pl.when(pl.program_id(1) == 0)
    def _init():
        sum_ref[...] = jnp.zeros_like(sum_ref)
        sumsq_ref[...] = jnp.zeros_like(sumsq_ref)

    acc = _conv_tile(xc_ref, xh_ref, w_ref, img_w=img_w, ksize_h=ksize_h)
    m = mask_ref[...]                                               # (TR, 1): valid rows only
    cm = acc * m
    sum_ref[0] += jnp.sum(cm, axis=0, keepdims=True)
    sumsq_ref[0] += jnp.sum(cm * acc, axis=0, keepdims=True)


# ----------------- pass 2: recompute conv -> folded BN (FMA) -> Mish ------------------- #
def _conv_bn_mish_kernel(xc_ref, xh_ref, w_ref, scale_ref, shift_ref, o_ref,
                         *, img_w, ksize_h, cout):
    acc = _conv_tile(xc_ref, xh_ref, w_ref, img_w=img_w, ksize_h=ksize_h)
    y = acc * scale_ref[...] + shift_ref[...]                       # (TR, Cpad) fp32

    # Mish: y * tanh(softplus(y)) == y * u / (u + 2),  u = e^y (e^y + 2)
    t = jnp.exp(jnp.minimum(y, 20.0))                               # EUP
    u = t * (t + 2.0)
    d = u + 2.0
    r = pl.reciprocal(d, approx=True)                               # EUP slot
    r = r * (2.0 - d * r)                                           # one Newton step (VPU)
    mish = jnp.where(y > 20.0, y, y * u * r)
    o_ref[0] = mish[:, :cout].astype(o_ref.dtype)                   # store only real channels


# -------------------------------------- wrapper ---------------------------------------- #
def simple_conv(x_nchw, weight_oihw, gamma, beta, *, eps=1e-3, row_tile=1024):
    """Forward of SimpleConv(in_ch, out_ch, k, stride=1, padding=0, bias=False):
    conv -> train-mode BatchNorm2d (batch stats, biased var, eps=1e-3) -> Mish. NCHW."""
    N, Cin, H, W = x_nchw.shape
    Cout, Cin_w, KH, KW = weight_oihw.shape
    assert Cin_w == Cin
    Ho, Wo = H - KH + 1, W - KW + 1
    # TODO(synk): stride != 1 / padding != 0 / bias=True variants not implemented (module
    # defaults only); BatchNorm running_mean/running_var updates are not produced.

    Cpad = _round_up(max(Cout, 128), 128)        # MXU lane width (VMEM-only padding)
    Ck = KW * Cin                                # KW folded into the contraction dim
    Ck_p = _round_up(Ck, 8)
    Q = Ho * W                                   # flattened "overcomplete" rows, q = ho*W + wo
    halo = (KH - 1) * W                          # rows a tile borrows from its successor
    halo_pad = _round_up(max(halo, 8), 8)

    TR = _round_up(min(row_tile, _round_up(Q, 8)), 8)
    TR = _round_up(TR, halo_pad)                 # halo block must land on a block boundary
    num_t = _cdiv(Q, TR)
    Qpad = num_t * TR
    HWp = (num_t + 1) * TR                       # zero slack so the halo block always exists

    # ---- layout glue (no FLOPs): NCHW -> channels-last rows, KW pre-shifted into channels
    x = jnp.transpose(x_nchw, (0, 2, 3, 1)).reshape(N, H * W, Cin).astype(jnp.float32)
    xp = jnp.pad(x, ((0, 0), (0, KW - 1), (0, 0)))
    x_w = jnp.concatenate([xp[:, kw:kw + H * W, :] for kw in range(KW)], axis=2)  # (N,HW,KW*Cin)
    x_w = jnp.pad(x_w, ((0, 0), (0, HWp - H * W), (0, Ck_p - Ck)))

    # conv weight (Cout,Cin,KH,KW) -> (KH, KW*Cin, Cpad), zero-padded, bf16 MXU operand
    w = jnp.transpose(weight_oihw, (2, 3, 1, 0)).reshape(KH, Ck, Cout)
    w = jnp.pad(w, ((0, 0), (0, Ck_p - Ck), (0, Cpad - Cout))).astype(jnp.bfloat16)

    # validity mask over flattened rows q:  valid iff q < Ho*W and (q mod W) < Wo
    q = jnp.arange(Qpad, dtype=jnp.int32)
    mask = ((q < Ho * W) & ((q % W) < Wo)).astype(jnp.float32).reshape(Qpad, 1)

    cparams = dict(vmem_limit_bytes=32 * 1024 * 1024)   # safe on v5e/v6e/v7x scoped VMEM

    # -------------- pass 1 (stats only): per-batch sum / sum-of-squares --------------
    csum_n, csumsq_n = pl.pallas_call(
        functools.partial(_stats_kernel, img_w=W, ksize_h=KH),
        grid=(N, num_t),
        in_specs=[
            pl.BlockSpec((1, TR, Ck_p), lambda n, t: (n, t, 0)),                      # tile
            pl.BlockSpec((1, halo_pad, Ck_p),
                         lambda n, t: (n, (t + 1) * (TR // halo_pad), 0)),            # halo
            pl.BlockSpec((KH, Ck_p, Cpad), lambda n, t: (0, 0, 0)),                   # weights
            pl.BlockSpec((TR, 1), lambda n, t: (t, 0)),                               # mask
        ],
        out_specs=[
            pl.BlockSpec((1, 1, Cpad), lambda n, t: (n, 0, 0)),   # per-batch resident acc
            pl.BlockSpec((1, 1, Cpad), lambda n, t: (n, 0, 0)),
        ],
        out_shape=[
            jax.ShapeDtypeStruct((N, 1, Cpad), jnp.float32),
            jax.ShapeDtypeStruct((N, 1, Cpad), jnp.float32),
        ],
        compiler_params=pltpu.CompilerParams(
            dimension_semantics=("parallel", "arbitrary"), **cparams),
    )(x_w, x_w, w, mask)

    # Tiny BN fold on Cout floats (wrapper-side XLA): batch mean / biased var -> scale/shift.
    # NOTE: E[x^2]-E[x]^2 in fp32, clamped >= 0 (see review; fine for activation-scale stats).
    inv_count = 1.0 / float(N * Ho * Wo)
    csum = jnp.sum(csum_n, axis=(0, 1))
    csumsq = jnp.sum(csumsq_n, axis=(0, 1))
    mean = csum * inv_count
    var = jnp.maximum(csumsq * inv_count - mean * mean, 0.0)
    g = jnp.pad(gamma.astype(jnp.float32), (0, Cpad - Cout))
    b = jnp.pad(beta.astype(jnp.float32), (0, Cpad - Cout))
    s = g * jax.lax.rsqrt(var + float(eps))
    scale = s.reshape(1, Cpad)
    shift = (b - mean * s).reshape(1, Cpad)

    # ---------- pass 2: recompute conv -> BN + Mish, output last dim = Cout ----------
    out_flat = pl.pallas_call(
        functools.partial(_conv_bn_mish_kernel, img_w=W, ksize_h=KH, cout=Cout),
        grid=(N, num_t),
        in_specs=[
            pl.BlockSpec((1, TR, Ck_p), lambda n, t: (n, t, 0)),
            pl.BlockSpec((1, halo_pad, Ck_p),
                         lambda n, t: (n, (t + 1) * (TR // halo_pad), 0)),
            pl.BlockSpec((KH, Ck_p, Cpad), lambda n, t: (0, 0, 0)),
            pl.BlockSpec((1, Cpad), lambda n, t: (0, 0)),
            pl.BlockSpec((1, Cpad), lambda n, t: (0, 0)),
        ],
        out_specs=pl.BlockSpec((1, TR, Cout), lambda n, t: (n, t, 0)),
        out_shape=jax.ShapeDtypeStruct((N, Qpad, Cout), jnp.float32),
        compiler_params=pltpu.CompilerParams(
            dimension_semantics=("parallel", "parallel"), **cparams),
    )(x_w, x_w, w, scale, shift)

    # NCHW assembly: drop wo >= Wo garbage columns + transpose (one fused XLA copy pass).
    # TODO(synk): if the consumer accepts NHWC, return the cropped NHWC view and skip this.
    out = out_flat[:, :Ho * W, :].reshape(N, Ho, W, Cout)[:, :, :Wo, :]
    return jnp.transpose(out, (0, 3, 1, 2))


# ------------------------------- pure-JAX references ----------------------------------- #
def _reference(x, w, gamma, beta, eps, conv_dtype):
    y = jax.lax.conv_general_dilated(
        x.astype(conv_dtype), w.astype(conv_dtype), (1, 1), "VALID",
        dimension_numbers=("NCHW", "OIHW", "NCHW"),
        preferred_element_type=jnp.float32)
    mean = jnp.mean(y, axis=(0, 2, 3), keepdims=True)
    var = jnp.mean((y - mean) ** 2, axis=(0, 2, 3), keepdims=True)    # biased, train-mode BN
    y = (y - mean) * jax.lax.rsqrt(var + eps)
    y = y * gamma.reshape(1, -1, 1, 1) + beta.reshape(1, -1, 1, 1)
    return y * jnp.tanh(jax.nn.softplus(y))                           # Mish


if __name__ == "__main__":
    key = jax.random.PRNGKey(0)
    k1, k2, k3, k4 = jax.random.split(key, 4)

    # small shapes consistent with the module (in_channels=4, out_channels=32, k=3)
    N, Cin, H, W = 2, 4, 16, 16
    Cout, KH, KW = 32, 3, 3
    eps = 1e-3   # SimpleConv default eps (passed to BatchNorm2d)

    x = jax.random.normal(k1, (N, Cin, H, W), jnp.float32)
    fan_in = Cin * KH * KW
    weight = jax.random.normal(k2, (Cout, Cin, KH, KW), jnp.float32) / jnp.sqrt(float(fan_in))
    gamma = 1.0 + 0.1 * jax.random.normal(k3, (Cout,), jnp.float32)   # BN weight
    beta = 0.1 * jax.random.normal(k4, (Cout,), jnp.float32)          # BN bias

    out = simple_conv(x, weight, gamma, beta, eps=eps)
    out = jax.block_until_ready(out)
    assert out.shape == (N, Cout, H - KH + 1, W - KW + 1), out.shape

    # (a) same dtype policy as the kernel (bf16 MXU operands, fp32 elsewhere): tight
    ref_bf16 = _reference(x, weight, gamma, beta, eps, conv_dtype=jnp.bfloat16)
    err_b = float(jnp.max(jnp.abs(out - ref_bf16)))
    assert jnp.allclose(out, ref_bf16, atol=2e-3, rtol=2e-3), err_b

    # (b) full-fp32 module semantics: loose (delta is bf16 rounding of the MXU operands)
    ref_f32 = _reference(x, weight, gamma, beta, eps, conv_dtype=jnp.float32)
    err_f = float(jnp.max(jnp.abs(out - ref_f32)))
    assert jnp.allclose(out, ref_f32, atol=3e-2, rtol=3e-2), err_f

    print("KERNEL_OK")
</pallas_src>

<mosaic_0001>
module attributes {stable_mosaic.version = 11 : i64} {
  func.func @_stats_kernel(%arg0: i32, %arg1: i32, %arg2: memref<1x224x16xf32, #tpu.memory_space<vmem>>, %arg3: memref<1x32x16xf32, #tpu.memory_space<vmem>>, %arg4: memref<3x16x128xbf16, #tpu.memory_space<vmem>>, %arg5: memref<224x1xf32, #tpu.memory_space<vmem>>, %arg6: memref<1x1x128xf32, #tpu.memory_space<vmem>>, %arg7: memref<1x1x128xf32, #tpu.memory_space<vmem>>) attributes {dimension_semantics = [#tpu.dimension_semantics<parallel>, #tpu.dimension_semantics<arbitrary>], iteration_bounds = array<i64: 2, 1>, scalar_prefetch = 0 : i64, scratch_operands = 0 : i64, tpu.core_type = #tpu.core_type<tc>, window_params = [{transform_indices = @transform_0, window_bounds = array<i64: 1, 224, 16>}, {transform_indices = @transform_1, window_bounds = array<i64: 1, 32, 16>}, {pipeline_mode = #tpu.pipeline_mode<synchronous>, transform_indices = @transform_2, window_bounds = array<i64: 3, 16, 128>}, {transform_indices = @transform_3, window_bounds = array<i64: 224, 1>}, {transform_indices = @transform_4, window_bounds = array<i64: 1, 1, 128>}, {transform_indices = @transform_5, window_bounds = array<i64: 1, 1, 128>}]} {
    %c0_i32 = arith.constant 0 : i32
    %0 = arith.cmpi eq, %arg1, %c0_i32 : i32
    %1 = arith.extui %0 : i1 to i32
    %c0_i32_0 = arith.constant 0 : i32
    %2 = arith.cmpi ne, %1, %c0_i32_0 : i32
    scf.if %2 {
      %cst_31 = arith.constant 0.000000e+00 : f32
      %43 = vector.broadcast %cst_31 : f32 to vector<1x1x128xf32>
      %c0_32 = arith.constant 0 : index
      %c0_33 = arith.constant 0 : index
      %c0_34 = arith.constant 0 : index
      %44 = vector.load %arg6[%c0_32, %c0_33, %c0_34] : memref<1x1x128xf32, #tpu.memory_space<vmem>>, vector<1x1x128xf32>
      tpu.vector_store %arg6[%c0_32, %c0_33, %c0_34], %43 {strides = array<i32>} : memref<1x1x128xf32, #tpu.memory_space<vmem>>, vector<1x1x128xf32>,
      %cst_35 = arith.constant 0.000000e+00 : f32
      %45 = vector.broadcast %cst_35 : f32 to vector<1x1x128xf32>
      %c0_36 = arith.constant 0 : index
      %c0_37 = arith.constant 0 : index
      %c0_38 = arith.constant 0 : index
      %46 = vector.load %arg7[%c0_36, %c0_37, %c0_38] : memref<1x1x128xf32, #tpu.memory_space<vmem>>, vector<1x1x128xf32>
      tpu.vector_store %arg7[%c0_36, %c0_37, %c0_38], %45 {strides = array<i32>} : memref<1x1x128xf32, #tpu.memory_space<vmem>>, vector<1x1x128xf32>,
    } else {
    }
    %c0 = arith.constant 0 : index
    %c0_1 = arith.constant 0 : index
    %c0_2 = arith.constant 0 : index
    %3 = vector.load %arg2[%c0, %c0_1, %c0_2] : memref<1x224x16xf32, #tpu.memory_space<vmem>>, vector<1x224x16xf32>
    %4 = vector.shape_cast %3 : vector<1x224x16xf32> to vector<224x16xf32>
    %c0_3 = arith.constant 0 : index
    %c0_4 = arith.constant 0 : index
    %c0_5 = arith.constant 0 : index
    %5 = vector.load %arg3[%c0_3, %c0_4, %c0_5] : memref<1x32x16xf32, #tpu.memory_space<vmem>>, vector<1x32x16xf32>
    %6 = vector.shape_cast %5 : vector<1x32x16xf32> to vector<32x16xf32>
    %7 = tpu.concatenate %4, %6 in 0 : vector<224x16xf32>, vector<32x16xf32> -> vector<256x16xf32>
    %8 = arith.truncf %7 : vector<256x16xf32> to vector<256x16xbf16>
    %9 = vector.extract_strided_slice %8 {offsets = [0, 0], sizes = [224, 16], strides = [1, 1]} : vector<256x16xbf16> to vector<224x16xbf16>
    %c0_6 = arith.constant 0 : index
    %c0_7 = arith.constant 0 : index
    %c0_8 = arith.constant 0 : index
    %10 = vector.load %arg4[%c0_6, %c0_7, %c0_8] : memref<3x16x128xbf16, #tpu.memory_space<vmem>>, vector<1x16x128xbf16>
    %11 = vector.shape_cast %10 : vector<1x16x128xbf16> to vector<16x128xbf16>
    %cst = arith.constant dense<0.000000e+00> : vector<224x128xf32>
    %12 = tpu.matmul %9, %11, %cst {dimension_numbers = #tpu.dot_dimension_numbers<[1], [0], [0], [1], [0, 0, 1, 1], [], []>} : vector<224x16xbf16>, vector<16x128xbf16>, vector<224x128xf32> -> vector<224x128xf32>
    %13 = vector.extract_strided_slice %8 {offsets = [16, 0], sizes = [224, 16], strides = [1, 1]} : vector<256x16xbf16> to vector<224x16xbf16>
    %c1 = arith.constant 1 : index
    %c0_9 = arith.constant 0 : index
    %c0_10 = arith.constant 0 : index
    %14 = vector.load %arg4[%c1, %c0_9, %c0_10] : memref<3x16x128xbf16, #tpu.memory_space<vmem>>, vector<1x16x128xbf16>
    %15 = vector.shape_cast %14 : vector<1x16x128xbf16> to vector<16x128xbf16>
    %cst_11 = arith.constant dense<0.000000e+00> : vector<224x128xf32>
    %16 = tpu.matmul %13, %15, %cst_11 {dimension_numbers = #tpu.dot_dimension_numbers<[1], [0], [0], [1], [0, 0, 1, 1], [], []>} : vector<224x16xbf16>, vector<16x128xbf16>, vector<224x128xf32> -> vector<224x128xf32>
    %17 = arith.addf %12, %16 : vector<224x128xf32>
    %18 = vector.extract_strided_slice %8 {offsets = [32, 0], sizes = [224, 16], strides = [1, 1]} : vector<256x16xbf16> to vector<224x16xbf16>
    %c2 = arith.constant 2 : index
    %c0_12 = arith.constant 0 : index
    %c0_13 = arith.constant 0 : index
    %19 = vector.load %arg4[%c2, %c0_12, %c0_13] : memref<3x16x128xbf16, #tpu.memory_space<vmem>>, vector<1x16x128xbf16>
    %20 = vector.shape_cast %19 : vector<1x16x128xbf16> to vector<16x128xbf16>
    %cst_14 = arith.constant dense<0.000000e+00> : vector<224x128xf32>
    %21 = tpu.matmul %18, %20, %cst_14 {dimension_numbers = #tpu.dot_dimension_numbers<[1], [0], [0], [1], [0, 0, 1, 1], [], []>} : vector<224x16xbf16>, vector<16x128xbf16>, vector<224x128xf32> -> vector<224x128xf32>
    %22 = arith.addf %17, %21 : vector<224x128xf32>
    %c0_15 = arith.constant 0 : index
    %c0_16 = arith.constant 0 : index
    %23 = vector.load %arg5[%c0_15, %c0_16] : memref<224x1xf32, #tpu.memory_space<vmem>>, vector<224x1xf32>
    %24 = vector.broadcast %23 : vector<224x1xf32> to vector<224x128xf32>
    %25 = arith.mulf %22, %24 : vector<224x128xf32>
    %c0_17 = arith.constant 0 : index
    %c0_18 = arith.constant 0 : index
    %c0_19 = arith.constant 0 : index
    %26 = vector.load %arg6[%c0_17, %c0_18, %c0_19] : memref<1x1x128xf32, #tpu.memory_space<vmem>>, vector<1x1x128xf32>
    %27 = vector.shape_cast %26 : vector<1x1x128xf32> to vector<1x128xf32>
    %cst_20 = arith.constant dense<0.000000e+00> : vector<128xf32>
    %28 = vector.multi_reduction <add>, %25, %cst_20 [0] : vector<224x128xf32> to vector<128xf32>
    %29 = vector.shape_cast %28 : vector<128xf32> to vector<1x128xf32>
    %30 = arith.addf %27, %29 : vector<1x128xf32>
    %c0_21 = arith.constant 0 : index
    %c0_22 = arith.constant 0 : index
    %c0_23 = arith.constant 0 : index
    %31 = vector.load %arg6[%c0_21, %c0_22, %c0_23] : memref<1x1x128xf32, #tpu.memory_space<vmem>>, vector<1x1x128xf32>
    %32 = vector.shape_cast %31 : vector<1x1x128xf32> to vector<1x128xf32>
    %33 = vector.shape_cast %30 : vector<1x128xf32> to vector<1x1x128xf32>
    tpu.vector_store %arg6[%c0_21, %c0_22, %c0_23], %33 {strides = array<i32>} : memref<1x1x128xf32, #tpu.memory_space<vmem>>, vector<1x1x128xf32>,
    %c0_24 = arith.constant 0 : index
    %c0_25 = arith.constant 0 : index
    %c0_26 = arith.constant 0 : index
    %34 = vector.load %arg7[%c0_24, %c0_25, %c0_26] : memref<1x1x128xf32, #tpu.memory_space<vmem>>, vector<1x1x128xf32>
    %35 = vector.shape_cast %34 : vector<1x1x128xf32> to vector<1x128xf32>
    %36 = arith.mulf %25, %22 : vector<224x128xf32>
    %cst_27 = arith.constant dense<0.000000e+00> : vector<128xf32>
    %37 = vector.multi_reduction <add>, %36, %cst_27 [0] : vector<224x128xf32> to vector<128xf32>
    %38 = vector.shape_cast %37 : vector<128xf32> to vector<1x128xf32>
    %39 = arith.addf %35, %38 : vector<1x128xf32>
    %c0_28 = arith.constant 0 : index
    %c0_29 = arith.constant 0 : index
    %c0_30 = arith.constant 0 : index
    %40 = vector.load %arg7[%c0_28, %c0_29, %c0_30] : memref<1x1x128xf32, #tpu.memory_space<vmem>>, vector<1x1x128xf32>
    %41 = vector.shape_cast %40 : vector<1x1x128xf32> to vector<1x128xf32>
    %42 = vector.shape_cast %39 : vector<1x128xf32> to vector<1x1x128xf32>
    tpu.vector_store %arg7[%c0_28, %c0_29, %c0_30], %42 {strides = array<i32>} : memref<1x1x128xf32, #tpu.memory_space<vmem>>, vector<1x1x128xf32>,
    return
  }
  func.func @transform_0(%arg0: i32, %arg1: i32) -> (i32, i32, i32) {
    %c0_i32 = arith.constant 0 : i32
    %c0_i32_0 = arith.constant 0 : i32
    return %arg0, %arg1, %c0_i32 : i32, i32, i32
  }
  func.func @transform_1(%arg0: i32, %arg1: i32) -> (i32, i32, i32) {
    %c1_i32 = arith.constant 1 : i32
    %0 = arith.addi %arg1, %c1_i32 : i32
    %c7_i32 = arith.constant 7 : i32
    %1 = arith.muli %0, %c7_i32 : i32
    %c0_i32 = arith.constant 0 : i32
    %c0_i32_0 = arith.constant 0 : i32
    return %arg0, %1, %c0_i32 : i32, i32, i32
  }
  func.func @transform_2(%arg0: i32, %arg1: i32) -> (i32, i32, i32) {
    %c0_i32 = arith.constant 0 : i32
    %c0_i32_0 = arith.constant 0 : i32
    %c0_i32_1 = arith.constant 0 : i32
    %c0_i32_2 = arith.constant 0 : i32
    return %c0_i32, %c0_i32_0, %c0_i32_1 : i32, i32, i32
  }
  func.func @transform_3(%arg0: i32, %arg1: i32) -> (i32, i32) {
    %c0_i32 = arith.constant 0 : i32
    %c0_i32_0 = arith.constant 0 : i32
    return %arg1, %c0_i32 : i32, i32
  }
  func.func @transform_4(%arg0: i32, %arg1: i32) -> (i32, i32, i32) {
    %c0_i32 = arith.constant 0 : i32
    %c0_i32_0 = arith.constant 0 : i32
    %c0_i32_1 = arith.constant 0 : i32
    return %arg0, %c0_i32, %c0_i32_0 : i32, i32, i32
  }
  func.func @transform_5(%arg0: i32, %arg1: i32) -> (i32, i32, i32) {
    %c0_i32 = arith.constant 0 : i32
    %c0_i32_0 = arith.constant 0 : i32
    %c0_i32_1 = arith.constant 0 : i32
    return %arg0, %c0_i32, %c0_i32_0 : i32, i32, i32
  }
}

</mosaic_0001>

<llo_original>
// kernel: tpu_custom_call.1
$region0: #{tpu_custom_call.1}
  #allocation0 [shape = 'u32[]', space=smem, size = 0x4, offset = 0x4, fixed_abs, tag = 'smem constant byte address 0x4 - core index']
  #allocation1 [shape = 'u32[144,128]{1,0:T(1,128)}', space=vmem, size = 0x12000, scoped, tag = 'internal scratch']
  %s0 = inlined_call_operand.vmem [shape: f32[2,448,16], index: 0, kind: input, shape index: {}]
  %s1 = inlined_call_operand.vmem [shape: f32[2,448,16], index: 1, kind: input, shape index: {}]
  %s2 = inlined_call_operand.vmem [shape: bf16[3,16,128], index: 2, kind: input, shape index: {}]
  %s3 = inlined_call_operand.vmem [shape: f32[224,1], index: 3, kind: input, shape index: {}]
  %s4 = inlined_call_operand.hbm [shape: f32[2,1,128], index: 4, kind: output, shape index: {0}]
  %s5 = inlined_call_operand.hbm [shape: f32[2,1,128], index: 5, kind: output, shape index: {1}]
  %6 = xla_tuple %s4, %s5
  %s7 = sld [smem:[#allocation0]]
  $region61: #{tpu_custom_call.1} parent=0
    _
  %s9 = ssub.s32 1, %s7
  %s10 = scalar_select 0, %s9, %s7
  $region1: #{tpu_custom_call.1} parent=0
    #allocation2 [shape = 'u8[1024]{0}', space=vmem, size = 0x400, scoped, tag = 'output window, operand 0']
    #allocation3 [shape = 's32[2]{0}', space=sflag, size = 0x8, scoped, tag = 'scoped memory for tpu_custom_call.1']
    #allocation4 [shape = 'u8[1024]{0}', space=vmem, size = 0x400, scoped, tag = 'output window, operand 1']
    #allocation5 [shape = 's32[2]{0}', space=sflag, size = 0x8, scoped, tag = 'scoped memory for tpu_custom_call.1']
    %11 = vsyncpa [#allocation3], 0
    %s12 = scalar_lea.sflag [#allocation3], 1
    %13 = vsyncpa %s12, 0
    %14 = vsyncpa [#allocation5], 0
    %s15 = scalar_lea.sflag [#allocation5], 1
    %16 = vsyncpa %s15, 0
    loop: start=0, step=1, limit=4
    $region2: #{tpu_custom_call.1} parent=1 // loop_pre_header
      _
    $region3: #{tpu_custom_call.1} parent=1 // loop_header
      %s18 = sphi 0, %s22
      %p19 = scmp.ge.s32.totalorder %s18, 4
      %s25 = sphi 0, %s37
      %s26 = sphi 0, %s33
      %s27 = sphi 0, %s25
      %s28 = sphi 0, %s26
      %s29 = sphi 0, %s27
      %s30 = sphi 0, %s28
      %s42 = sphi 0, %s44
      %s45 = sphi 0, %s42
      %s46 = sphi 0, %s45
      %s62 = sphi 0, %s46
      %s74 = sphi 0, %s76
      %s77 = sphi 0, %s74
      %s78 = sphi 0, %s77
      %s94 = sphi 0, %s78
      %s98 = sphi 0, %s98
      %s100 = sphi 0, %s98
      %s101 = sphi 0, %s100
      %s115 = sphi 0, %s101
      %s121 = sphi 0, %s123
      %s124 = sphi 0, %s121
      %s125 = sphi 0, %s124
      %s141 = sphi 0, %s125
      %s147 = sphi 0, %s149
      %s150 = sphi 0, %s147
      %s151 = sphi 0, %s150
      %s167 = sphi 0, %s151
      %s173 = sphi 0, %s175
      %s176 = sphi 0, %s173
      %s177 = sphi 0, %s176
      %s193 = sphi 0, %s177
    $region4: #{tpu_custom_call.1} parent=1 // loop_header_branch
      %21 = sbr.rel (%p19) target = $region8
    $region5: #{tpu_custom_call.1} parent=1 // loop_body
      %s23 = ssub.s32 %s18, 1
      %s24 = ssub.s32 %s18, 2
      %s31 = sadd.s32 1, %s26
      %p32 = scmp.ge.s32.totalorder %s31, 1
      %s33 = scalar_select %p32, 0, %s31
      %s34 = sadd.s32 1, %s25
      %s35 = scalar_select %p32, %s34, %s25
      %p36 = scmp.ge.s32.totalorder %s35, 2
      %s37 = scalar_select %p36, 0, %s35
      %s38 = ssub.s32 %s25, %s37
      %s39 = ssub.s32 %s26, %s33
      %s40 = sor.u32 %s38, %s39
      %p41 = scmp.eq.s32.totalorder %s40, 0
      %s43 = sadd.s32 %s42, 1
      %s44 = scalar_select %p41, %s42, %s43
      %p47 = pneg %p41
      %p48 = scmp.eq.s32.totalorder %s18, 1
      %p49 = por %p47, %p48
      %p50 = scmp.ne.s32.totalorder %s42, %s45
      %p51 = scmp.eq.s32.totalorder %s18, 0
      %p52 = por %p50, %p51
      %p53 = scmp.ne.s32.totalorder %s42, %s45
      %p54 = scmp.eq.s32.totalorder %s23, 1
      %p55 = por %p53, %p54
      %p56 = scmp.ne.s32.totalorder %s45, %s46
      %p57 = scmp.eq.s32.totalorder %s23, 0
      %p58 = por %p56, %p57
      %p59 = scmp.ne.s32.totalorder %s45, %s46
      %p60 = scmp.eq.s32.totalorder %s24, 1
      %p61 = por %p59, %p60
      %p63 = scmp.ne.s32.totalorder %s46, %s62
      %p64 = scmp.eq.s32.totalorder %s24, 0
      %p65 = por %p63, %p64
      %s66 = sadd.s32 %s26, 1
      %s67 = smul.u32 %s66, 7
      %s68 = sadd.s32 %s33, 1
      %s69 = smul.u32 %s68, 7
      %s70 = ssub.s32 %s25, %s37
      %s71 = ssub.s32 %s67, %s69
      %s72 = sor.u32 %s70, %s71
      %p73 = scmp.eq.s32.totalorder %s72, 0
      %s75 = sadd.s32 %s74, 1
      %s76 = scalar_select %p73, %s74, %s75
      %p79 = pneg %p73
      %p80 = scmp.eq.s32.totalorder %s18, 1
      %p81 = por %p79, %p80
      %p82 = scmp.ne.s32.totalorder %s74, %s77
      %p83 = scmp.eq.s32.totalorder %s18, 0
      %p84 = por %p82, %p83
      %p85 = scmp.ne.s32.totalorder %s74, %s77
      %p86 = scmp.eq.s32.totalorder %s23, 1
      %p87 = por %p85, %p86
      %p88 = scmp.ne.s32.totalorder %s77, %s78
      %p89 = scmp.eq.s32.totalorder %s23, 0
      %p90 = por %p88, %p89
      %p91 = scmp.ne.s32.totalorder %s77, %s78
      %p92 = scmp.eq.s32.totalorder %s24, 1
      %p93 = por %p91, %p92
      %p95 = scmp.ne.s32.totalorder %s78, %s94
      %p96 = scmp.eq.s32.totalorder %s24, 0
      %p97 = por %p95, %p96
      %s99 = sadd.s32 %s98, 1
      %p102 = scmp.eq.s32.totalorder %s18, 1
      %p103 = scmp.ne.s32.totalorder %s98, %s100
      %p104 = scmp.eq.s32.totalorder %s18, 0
      %p105 = por %p103, %p104
      %p106 = scmp.ne.s32.totalorder %s98, %s100
      %p107 = scmp.eq.s32.totalorder %s23, 1
      %p108 = por %p106, %p107
      %p109 = scmp.ne.s32.totalorder %s100, %s101
      %p110 = scmp.eq.s32.totalorder %s23, 0
      %p111 = por %p109, %p110
      %p112 = scmp.ne.s32.totalorder %s100, %s101
      %p113 = scmp.eq.s32.totalorder %s24, 1
      %p114 = por %p112, %p113
      %p116 = scmp.ne.s32.totalorder %s101, %s115
      %p117 = scmp.eq.s32.totalorder %s24, 0
      %p118 = por %p116, %p117
      %s119 = ssub.s32 %s26, %s33
      %p120 = scmp.eq.s32.totalorder %s119, 0
      %s122 = sadd.s32 %s121, 1
      %s123 = scalar_select %p120, %s121, %s122
      %p126 = pneg %p120
      %p127 = scmp.eq.s32.totalorder %s18, 1
      %p128 = por %p126, %p127
      %p129 = scmp.ne.s32.totalorder %s121, %s124
      %p130 = scmp.eq.s32.totalorder %s18, 0
      %p131 = por %p129, %p130
      %p132 = scmp.ne.s32.totalorder %s121, %s124
      %p133 = scmp.eq.s32.totalorder %s23, 1
      %p134 = por %p132, %p133
      %p135 = scmp.ne.s32.totalorder %s124, %s125
      %p136 = scmp.eq.s32.totalorder %s23, 0
      %p137 = por %p135, %p136
      %p138 = scmp.ne.s32.totalorder %s124, %s125
      %p139 = scmp.eq.s32.totalorder %s24, 1
      %p140 = por %p138, %p139
      %p142 = scmp.ne.s32.totalorder %s125, %s141
      %p143 = scmp.eq.s32.totalorder %s24, 0
      %p144 = por %p142, %p143
      %s145 = ssub.s32 %s25, %s37
      %p146 = scmp.eq.s32.totalorder %s145, 0
      %s148 = sadd.s32 %s147, 1
      %s149 = scalar_select %p146, %s147, %s148
      %p152 = pneg %p146
      %p153 = scmp.eq.s32.totalorder %s18, 1
      %p154 = por %p152, %p153
      %p155 = scmp.ne.s32.totalorder %s147, %s150
      %p156 = scmp.eq.s32.totalorder %s18, 0
      %p157 = por %p155, %p156
      %p158 = scmp.ne.s32.totalorder %s147, %s150
      %p159 = scmp.eq.s32.totalorder %s23, 1
      %p160 = por %p158, %p159
      %p161 = scmp.ne.s32.totalorder %s150, %s151
      %p162 = scmp.eq.s32.totalorder %s23, 0
      %p163 = por %p161, %p162
      %p164 = scmp.ne.s32.totalorder %s150, %s151
      %p165 = scmp.eq.s32.totalorder %s24, 1
      %p166 = por %p164, %p165
      %p168 = scmp.ne.s32.totalorder %s151, %s167
      %p169 = scmp.eq.s32.totalorder %s24, 0
      %p170 = por %p168, %p169
      %s171 = ssub.s32 %s25, %s37
      %p172 = scmp.eq.s32.totalorder %s171, 0
      %s174 = sadd.s32 %s173, 1
      %s175 = scalar_select %p172, %s173, %s174
      %p178 = pneg %p172
      %p179 = scmp.eq.s32.totalorder %s18, 1
      %p180 = por %p178, %p179
      %p181 = scmp.ne.s32.totalorder %s173, %s176
      %p182 = scmp.eq.s32.totalorder %s18, 0
      %p183 = por %p181, %p182
      %p184 = scmp.ne.s32.totalorder %s173, %s176
      %p185 = scmp.eq.s32.totalorder %s23, 1
      %p186 = por %p184, %p185
      %p187 = scmp.ne.s32.totalorder %s176, %s177
      %p188 = scmp.eq.s32.totalorder %s23, 0
      %p189 = por %p187, %p188
      %p190 = scmp.ne.s32.totalorder %s176, %s177
      %p191 = scmp.eq.s32.totalorder %s24, 1
      %p192 = por %p190, %p191
      %p194 = scmp.ne.s32.totalorder %s177, %s193
      %p195 = scmp.eq.s32.totalorder %s24, 0
      %p196 = por %p194, %p195
      %p197 = scmp.le.s32.totalorder 1, %s18
      %p198 = scmp.lt.s32.totalorder %s18, 3
      %p199 = pnand %p197, %p198
      %p200 = pneg %p199
      // Predicated region
      $region9: #{tpu_custom_call.1} parent=5 // pred_check
        _
      $region10: #{tpu_custom_call.1} parent=5 // pred_check_branch
        %202 = sbr.rel (%p199) target = $region12
      $region11: #{tpu_custom_call.1} parent=5 // pred_region
        %s203 = ssub.s32 %s18, 1
        // Predicated region
        $region13: #{tpu_custom_call.1} parent=11 // pred_check
          %p204 = pneg %p111
        $region14: #{tpu_custom_call.1} parent=11 // pred_check_branch
          %206 = sbr.rel (%p204) target = $region16
        $region15: #{tpu_custom_call.1} parent=11 // pred_region
          _
        $region16: #{tpu_custom_call.1} parent=11 // pred_fallthru
          _
        // Predicated region
        $region17: #{tpu_custom_call.1} parent=11 // pred_check
          %p207 = pneg %p137
        $region18: #{tpu_custom_call.1} parent=11 // pred_check_branch
          %209 = sbr.rel (%p207) target = $region20
        $region19: #{tpu_custom_call.1} parent=11 // pred_region
          %s210 = smul.u32 28, %s28
          %p211 = scmp.lt.s32.totalorder %s210, 27
          %s212 = scalar_select %p211, %s210, 27
          %s213 = smul.addr %s212, 8
          %s214 = scalar_lea.vmem %s3, %s213
          %s215 = smul.u32 28, %s28
        $region20: #{tpu_custom_call.1} parent=11 // pred_fallthru
          _
      $region12: #{tpu_custom_call.1} parent=5 // pred_fallthru
        _
      %p216 = scmp.lt.s32.totalorder %s18, 2
      // Predicated region
      $region21: #{tpu_custom_call.1} parent=5 // pred_check
        %p217 = pneg %p216
      $region22: #{tpu_custom_call.1} parent=5 // pred_check_branch
        %219 = sbr.rel (%p217) target = $region24
      $region23: #{tpu_custom_call.1} parent=5 // pred_region
        // Predicated region
        $region25: #{tpu_custom_call.1} parent=23 // pred_check
          %p220 = pneg %p52
        $region26: #{tpu_custom_call.1} parent=23 // pred_check_branch
          %222 = sbr.rel (%p220) target = $region28
        $region27: #{tpu_custom_call.1} parent=23 // pred_region
          %s223 = smul.u32 28, %s26
          %p224 = scmp.lt.s32.totalorder %s25, 1
          %s225 = scalar_select %p224, %s25, 1
          %p226 = scmp.lt.s32.totalorder %s223, 55
          %s227 = scalar_select %p226, %s223, 55
          %s228 = smul.addr %s225, 56
          %s229 = sadd.s32 %s227, %s228
          %s230 = smul.addr %s229, 8
          %s231 = scalar_lea.vmem %s0, %s230
          %s232 = smul.u32 28, %s26
        $region28: #{tpu_custom_call.1} parent=23 // pred_fallthru
          _
        // Predicated region
        $region29: #{tpu_custom_call.1} parent=23 // pred_check
          %p233 = pneg %p84
        $region30: #{tpu_custom_call.1} parent=23 // pred_check_branch
          %235 = sbr.rel (%p233) target = $region32
        $region31: #{tpu_custom_call.1} parent=23 // pred_region
          %s236 = sadd.s32 %s26, 1
          %s237 = smul.u32 %s236, 7
          %s238 = smul.u32 4, %s237
          %p239 = scmp.lt.s32.totalorder %s25, 1
          %s240 = scalar_select %p239, %s25, 1
          %p241 = scmp.lt.s32.totalorder %s238, 55
          %s242 = scalar_select %p241, %s238, 55
          %s243 = smul.addr %s240, 56
          %s244 = sadd.s32 %s242, %s243
          %s245 = smul.addr %s244, 8
          %s246 = scalar_lea.vmem %s1, %s245
          %s247 = sadd.s32 %s26, 1
          %s248 = smul.u32 %s247, 7
          %s249 = smul.u32 4, %s248
        $region32: #{tpu_custom_call.1} parent=23 // pred_fallthru
          _
      $region24: #{tpu_custom_call.1} parent=5 // pred_fallthru
        _
      %p250 = scmp.le.s32.totalorder 1, %s18
      %p251 = scmp.lt.s32.totalorder %s18, 3
      %p252 = pnand %p250, %p251
      %p253 = pneg %p252
      // Predicated region
      $region33: #{tpu_custom_call.1} parent=5 // pred_check
        _
      $region34: #{tpu_custom_call.1} parent=5 // pred_check_branch
        %255 = sbr.rel (%p252) target = $region36
      $region35: #{tpu_custom_call.1} parent=5 // pred_region
        %s256 = ssub.s32 %s18, 1
        %s257 = smul.u32 28, %s28
        %p258 = scmp.lt.s32.totalorder %s27, 1
        %s259 = scalar_select %p258, %s27, 1
        %p260 = scmp.lt.s32.totalorder %s257, 55
        %s261 = scalar_select %p260, %s257, 55
        %s262 = smul.addr %s259, 56
        %s263 = sadd.s32 %s261, %s262
        %s264 = smul.addr %s263, 8
        %s265 = scalar_lea.vmem %s0, %s264
        %p266 = pneg %p58
        %p267 = pneg %p55
        %s268 = sadd.s32 %s28, 1
        %s269 = smul.u32 %s268, 7
        %s270 = smul.u32 4, %s269
        %p271 = scmp.lt.s32.totalorder %s27, 1
        %s272 = scalar_select %p271, %s27, 1
        %p273 = scmp.lt.s32.totalorder %s270, 55
        %s274 = scalar_select %p273, %s270, 55
        %s275 = smul.addr %s272, 56
        %s276 = sadd.s32 %s274, %s275
        %s277 = smul.addr %s276, 8
        %s278 = scalar_lea.vmem %s1, %s277
        %p279 = pneg %p90
        %p280 = pneg %p87
        %p281 = pneg %p111
        %p282 = pneg %p108
        %s283 = smul.u32 28, %s28
        %p284 = scmp.lt.s32.totalorder %s283, 27
        %s285 = scalar_select %p284, %s283, 27
        %s286 = smul.addr %s285, 8
        %s287 = scalar_lea.vmem %s3, %s286
        %p288 = pneg %p137
        %p289 = pneg %p134
        %p290 = pneg %p163
        %p291 = pneg %p160
        %s292 = sand.u32 %s150, 1
        %s293 = scalar_lea.sflag [#allocation3], %s292
        %s294 = sand.u32 %s150, 1
        %s295 = scalar_lea.vmem [#allocation2], %s294
        %p296 = pneg %p189
        %p297 = pneg %p186
        %s298 = sand.u32 %s176, 1
        %s299 = scalar_lea.sflag [#allocation5], %s298
        %s300 = sand.u32 %s176, 1
        %s301 = scalar_lea.vmem [#allocation4], %s300
        %s302 = smul.u32 28, %s28
        %p303 = scmp.lt.s32.totalorder %s27, 1
        %s304 = scalar_select %p303, %s27, 1
        %p305 = scmp.lt.s32.totalorder %s302, 55
        %s306 = scalar_select %p305, %s302, 55
        %s307 = smul.addr %s304, 56
        %s308 = sadd.s32 %s306, %s307
        %s309 = smul.addr %s308, 8
        %s310 = scalar_lea.vmem %s0, %s309
        %s311 = smul.u32 28, %s28
        %s312 = sadd.s32 %s28, 1
        %s313 = smul.u32 %s312, 7
        %s314 = smul.u32 4, %s313
        %p315 = scmp.lt.s32.totalorder %s27, 1
        %s316 = scalar_select %p315, %s27, 1
        %p317 = scmp.lt.s32.totalorder %s314, 55
        %s318 = scalar_select %p317, %s314, 55
        %s319 = smul.addr %s316, 56
        %s320 = sadd.s32 %s318, %s319
        %s321 = smul.addr %s320, 8
        %s322 = scalar_lea.vmem %s1, %s321
        %s323 = sadd.s32 %s28, 1
        %s324 = smul.u32 %s323, 7
        %s325 = smul.u32 4, %s324
        %s326 = smul.u32 28, %s28
        %p327 = scmp.lt.s32.totalorder %s326, 27
        %s328 = scalar_select %p327, %s326, 27
        %s329 = smul.addr %s328, 8
        %s330 = scalar_lea.vmem %s3, %s329
        %s331 = smul.u32 28, %s28
        %p333 = scmp.eq.s32.totalorder %s28, 0
        // Predicated region
        $region37: #{tpu_custom_call.1} parent=35 // pred_check
          %p334 = pneg %p333
        $region38: #{tpu_custom_call.1} parent=35 // pred_check_branch
          %336 = sbr.rel (%p334) target = $region40
        $region39: #{tpu_custom_call.1} parent=35 // pred_region
          %337 = vst [vmem:[%s295] sm:$0x1] 0.0
          %338 = vst [vmem:[%s301] sm:$0x1] 0.0
        $region40: #{tpu_custom_call.1} parent=35 // pred_fallthru
          _
        %v339 = vld [vmem:[%s310] sm:$0xff]
        %v340 = vld [vmem:[%s310 + $0x8] sm:$0xff]
        %v341 = vld [vmem:[%s310 + $0x10] sm:$0xff]
        %v342 = vld [vmem:[%s310 + $0x18] sm:$0xff]
        %v343 = vld [vmem:[%s310 + $0x20] sm:$0xff]
        %v344 = vld [vmem:[%s310 + $0x28] sm:$0xff]
        %v345 = vld [vmem:[%s310 + $0x30] sm:$0xff]
        %v346 = vld [vmem:[%s310 + $0x38] sm:$0xff]
        %v347 = vld [vmem:[%s310 + $0x40] sm:$0xff]
        %v348 = vld [vmem:[%s310 + $0x48] sm:$0xff]
        %v349 = vld [vmem:[%s310 + $0x50] sm:$0xff]
        %v350 = vld [vmem:[%s310 + $0x58] sm:$0xff]
        %v351 = vld [vmem:[%s310 + $0x60] sm:$0xff]
        %v352 = vld [vmem:[%s310 + $0x68] sm:$0xff]
        %v353 = vld [vmem:[%s310 + $0x70] sm:$0xff]
        %v354 = vld [vmem:[%s310 + $0x78] sm:$0xff]
        %v355 = vld [vmem:[%s310 + $0x80] sm:$0xff]
        %v356 = vld [vmem:[%s310 + $0x88] sm:$0xff]
        %v357 = vld [vmem:[%s310 + $0x90] sm:$0xff]
        %v358 = vld [vmem:[%s310 + $0x98] sm:$0xff]
        %v359 = vld [vmem:[%s310 + $0xa0] sm:$0xff]
        %v360 = vld [vmem:[%s310 + $0xa8] sm:$0xff]
        %v361 = vld [vmem:[%s310 + $0xb0] sm:$0xff]
        %v362 = vld [vmem:[%s310 + $0xb8] sm:$0xff]
        %v363 = vld [vmem:[%s310 + $0xc0] sm:$0xff]
        %v364 = vld [vmem:[%s310 + $0xc8] sm:$0xff]
        %v365 = vld [vmem:[%s310 + $0xd0] sm:$0xff]
        %v366 = vld [vmem:[%s310 + $0xd8] sm:$0xff]
        %v367 = vld [vmem:[%s322] sm:$0xff]
        %v368 = vld [vmem:[%s322 + $0x8] sm:$0xff]
        %v369 = vld [vmem:[%s322 + $0x10] sm:$0xff]
        %v370 = vld [vmem:[%s322 + $0x18] sm:$0xff]
        %v371 = vpack.c.bf16 %v340, %v339
        %v372 = vpack.c.bf16 %v342, %v341
        %v373 = vpack.c.bf16 %v344, %v343
        %v374 = vpack.c.bf16 %v346, %v345
        %v375 = vpack.c.bf16 %v348, %v347
        %v376 = vpack.c.bf16 %v350, %v349
        %v377 = vpack.c.bf16 %v352, %v351
        %v378 = vpack.c.bf16 %v354, %v353
        %v379 = vpack.c.bf16 %v356, %v355
        %v380 = vpack.c.bf16 %v358, %v357
        %v381 = vpack.c.bf16 %v360, %v359
        %v382 = vpack.c.bf16 %v362, %v361
        %v383 = vpack.c.bf16 %v364, %v363
        %v384 = vpack.c.bf16 %v366, %v365
        %v385 = vpack.c.bf16 %v368, %v367
        %v386 = vpack.c.bf16 %v370, %v369
        %v387 = vld [vmem:[%s2] sm:$0xf]
        %v388 = vld [vmem:[%s2 + $0x4] sm:$0xf]
        %s389 = scalar_lea.vmem %s2, 8
        %v390 = vld [vmem:[%s389] sm:$0xf]
        %v391 = vld [vmem:[%s389 + $0x4] sm:$0xf]
        %v394 = vunpack.c.l.b16 %v390
        %v395 = vunpack.c.l.b16 %v391
        %v396 = vpack.c.b16 %v395, %v394
        %vm398 = vcmask 130048
        %v400 = vsel %vm398, %v372, 0
        %v403 = vsel %vm398, %v373, 0
        %v406 = vsel %vm398, %v374, 0
        %v409 = vsel %vm398, %v375, 0
        %v412 = vsel %vm398, %v376, 0
        %v415 = vsel %vm398, %v377, 0
        %v418 = vsel %vm398, %v378, 0
        %v421 = vsel %vm398, %v379, 0
        %v424 = vsel %vm398, %v380, 0
        %v427 = vsel %vm398, %v381, 0
        %v430 = vsel %vm398, %v382, 0
        %v433 = vsel %vm398, %v383, 0
        %v436 = vsel %vm398, %v384, 0
        %v439 = vsel %vm398, %v385, 0
        %441 = vmatprep.subr.bf16.mxu0 0
        %442 = vmatpush1.bf16.msra.mxu0 %v396
        %443 = vmatprep.subr.bf16.mxu0 0
        %444 = vmatpush1.bf16.msra.mxu0 0
        %445 = vmatprep.subr.bf16.mxu0 0
        %446 = vmatpush1.bf16.msra.mxu0 0
        %447 = vmatprep.subr.bf16.mxu0 0
        %448 = vmatpush1.bf16.msra.mxu0 0
        %449 = vmatprep.subr.bf16.mxu0 0
        %450 = vmatpush1.bf16.msra.mxu0 0
        %451 = vmatprep.subr.bf16.mxu0 0
        %452 = vmatpush1.bf16.msra.mxu0 0
        %453 = vmatprep.subr.bf16.mxu0 0
        %454 = vmatpush1.bf16.msra.mxu0 0
        %455 = vmatprep.subr.bf16.mxu0 0
        %456 = vmatpush1.bf16.msra.mxu0 0
        %457 = vmatprep.subr.bf16.mxu0 0
        %458 = vmatpush1.bf16.msra.mxu0 0
        %459 = vmatprep.subr.bf16.mxu0 0
        %460 = vmatpush1.bf16.msra.mxu0 0
        %461 = vmatprep.subr.bf16.mxu0 0
        %462 = vmatpush1.bf16.msra.mxu0 0
        %463 = vmatprep.subr.bf16.mxu0 0
        %464 = vmatpush1.bf16.msra.mxu0 0
        %465 = vmatprep.subr.bf16.mxu0 0
        %466 = vmatpush1.bf16.msra.mxu0 0
        %467 = vmatprep.subr.bf16.mxu0 0
        %468 = vmatpush1.bf16.msra.mxu0 0
        %469 = vmatprep.subr.bf16.mxu0 0
        %470 = vmatpush1.bf16.msra.mxu0 0
        %471 = vmatprep.subr.bf16.mxu0 0
        %472 = vmatpush1.bf16.msra.mxu0 0
        %473 = vmatprep.mubr.bf16.mxu0 0
        %474 = vmatmul.mubr.bf16.gmra.mrb[0].mxu0 %v400
        %v475 = vpop.f32.mrb[0].mxu0
        %v476 = vadd.f32 0.0, %v475
        %v477 = vpop.f32.mrb[0].mxu0
        %v478 = vpop.f32.mrb[0].mxu0
        %v479 = vadd.f32 0.0, %v478
        %v480 = vpop.f32.mrb[0].mxu0
        %481 = vmatprep.mubr.bf16.mxu0 0
        %482 = vmatmul.mubr.bf16.gmra.mrb[0].mxu0 %v403
        %v483 = vpop.f32.mrb[0].mxu0
        %v484 = vadd.f32 0.0, %v483
        %v485 = vpop.f32.mrb[0].mxu0
        %v486 = vpop.f32.mrb[0].mxu0
        %v487 = vadd.f32 0.0, %v486
        %v488 = vpop.f32.mrb[0].mxu0
        %489 = vmatprep.mubr.bf16.mxu0 0
        %490 = vmatmul.mubr.bf16.gmra.mrb[0].mxu0 %v406
        %v491 = vpop.f32.mrb[0].mxu0
        %v492 = vadd.f32 0.0, %v491
        %v493 = vpop.f32.mrb[0].mxu0
        %v494 = vpop.f32.mrb[0].mxu0
        %v495 = vadd.f32 0.0, %v494
        %v496 = vpop.f32.mrb[0].mxu0
        %497 = vmatprep.mubr.bf16.mxu0 0
        %498 = vmatmul.mubr.bf16.gmra.mrb[0].mxu0 %v409
        %v499 = vpop.f32.mrb[0].mxu0
        %v500 = vadd.f32 0.0, %v499
        %v501 = vpop.f32.mrb[0].mxu0
        %v502 = vpop.f32.mrb[0].mxu0
        %v503 = vadd.f32 0.0, %v502
        %v504 = vpop.f32.mrb[0].mxu0
        %505 = vmatprep.mubr.bf16.mxu0 0
        %506 = vmatmul.mubr.bf16.gmra.mrb[0].mxu0 %v412
        %v507 = vpop.f32.mrb[0].mxu0
        %v508 = vadd.f32 0.0, %v507
        %v509 = vpop.f32.mrb[0].mxu0
        %v510 = vpop.f32.mrb[0].mxu0
        %v511 = vadd.f32 0.0, %v510
        %v512 = vpop.f32.mrb[0].mxu0
        %513 = vmatprep.mubr.bf16.mxu0 0
        %514 = vmatmul.mubr.bf16.gmra.mrb[0].mxu0 %v415
        %v515 = vpop.f32.mrb[0].mxu0
        %v516 = vadd.f32 0.0, %v515
        %v517 = vpop.f32.mrb[0].mxu0
        %v518 = vpop.f32.mrb[0].mxu0
        %v519 = vadd.f32 0.0, %v518
        %v520 = vpop.f32.mrb[0].mxu0
        %521 = vmatprep.mubr.bf16.mxu0 0
        %522 = vmatmul.mubr.bf16.gmra.mrb[0].mxu0 %v418
        %v523 = vpop.f32.mrb[0].mxu0
        %v524 = vadd.f32 0.0, %v523
        %v525 = vpop.f32.mrb[0].mxu0
        %v526 = vpop.f32.mrb[0].mxu0
        %v527 = vadd.f32 0.0, %v526
        %v528 = vpop.f32.mrb[0].mxu0
        %529 = vmatprep.mubr.bf16.mxu0 0
        %530 = vmatmul.mubr.bf16.gmra.mrb[0].mxu0 %v421
        %v531 = vpop.f32.mrb[0].mxu0
        %v532 = vadd.f32 0.0, %v531
        %v533 = vpop.f32.mrb[0].mxu0
        %v534 = vpop.f32.mrb[0].mxu0
        %v535 = vadd.f32 0.0, %v534
        %v536 = vpop.f32.mrb[0].mxu0
        %537 = vmatprep.mubr.bf16.mxu0 0
        %538 = vmatmul.mubr.bf16.gmra.mrb[0].mxu0 %v424
        %v539 = vpop.f32.mrb[0].mxu0
        %v540 = vadd.f32 0.0, %v539
        %v541 = vpop.f32.mrb[0].mxu0
        %v542 = vpop.f32.mrb[0].mxu0
        %v543 = vadd.f32 0.0, %v542
        %v544 = vpop.f32.mrb[0].mxu0
        %545 = vmatprep.mubr.bf16.mxu0 0
        %546 = vmatmul.mubr.bf16.gmra.mrb[0].mxu0 %v427
        %v547 = vpop.f32.mrb[0].mxu0
        %v548 = vadd.f32 0.0, %v547
        %v549 = vpop.f32.mrb[0].mxu0
        %v550 = vpop.f32.mrb[0].mxu0
        %v551 = vadd.f32 0.0, %v550
        %v552 = vpop.f32.mrb[0].mxu0
        %553 = vmatprep.mubr.bf16.mxu0 0
        %554 = vmatmul.mubr.bf16.gmra.mrb[0].mxu0 %v430
        %v555 = vpop.f32.mrb[0].mxu0
        %v556 = vadd.f32 0.0, %v555
        %v557 = vpop.f32.mrb[0].mxu0
        %v558 = vpop.f32.mrb[0].mxu0
        %v559 = vadd.f32 0.0, %v558
        %v560 = vpop.f32.mrb[0].mxu0
        %561 = vmatprep.mubr.bf16.mxu0 0
        %562 = vmatmul.mubr.bf16.gmra.mrb[0].mxu0 %v433
        %v563 = vpop.f32.mrb[0].mxu0
        %v564 = vadd.f32 0.0, %v563
        %v565 = vpop.f32.mrb[0].mxu0
        %v566 = vpop.f32.mrb[0].mxu0
        %v567 = vadd.f32 0.0, %v566
        %v568 = vpop.f32.mrb[0].mxu0
        %569 = vmatprep.mubr.bf16.mxu0 0
        %570 = vmatmul.mubr.bf16.gmra.mrb[0].mxu0 %v436
        %v571 = vpop.f32.mrb[0].mxu0
        %v572 = vadd.f32 0.0, %v571
        %v573 = vpop.f32.mrb[0].mxu0
        %v574 = vpop.f32.mrb[0].mxu0
        %v575 = vadd.f32 0.0, %v574
        %v576 = vpop.f32.mrb[0].mxu0
        %577 = vmatprep.mubr.bf16.mxu0 0
        %578 = vmatmul.mubr.bf16.gmra.mrb[0].mxu0 %v439
        %v579 = vpop.f32.mrb[0].mxu0
        %v580 = vadd.f32 0.0, %v579
        %v581 = vpop.f32.mrb[0].mxu0
        %v582 = vpop.f32.mrb[0].mxu0
        %v583 = vadd.f32 0.0, %v582
        %v584 = vpop.f32.mrb[0].mxu0
        %585 = vdwg.mxu0
        %v588 = vunpack.c.l.b16 %v387
        %v589 = vunpack.c.l.b16 %v388
        %v590 = vpack.c.b16 %v589, %v588
        %v593 = vsel %vm398, %v371, 0
        %595 = vmatprep.subr.bf16.mxu0 0
        %596 = vmatpush1.bf16.msra.mxu0 %v590
        %597 = vmatprep.subr.bf16.mxu0 0
        %598 = vmatpush1.bf16.msra.mxu0 0
        %599 = vmatprep.subr.bf16.mxu0 0
        %600 = vmatpush1.bf16.msra.mxu0 0
        %601 = vmatprep.subr.bf16.mxu0 0
        %602 = vmatpush1.bf16.msra.mxu0 0
        %603 = vmatprep.subr.bf16.mxu0 0
        %604 = vmatpush1.bf16.msra.mxu0 0
        %605 = vmatprep.subr.bf16.mxu0 0
        %606 = vmatpush1.bf16.msra.mxu0 0
        %607 = vmatprep.subr.bf16.mxu0 0
        %608 = vmatpush1.bf16.msra.mxu0 0
        %609 = vmatprep.subr.bf16.mxu0 0
        %610 = vmatpush1.bf16.msra.mxu0 0
        %611 = vmatprep.subr.bf16.mxu0 0
        %612 = vmatpush1.bf16.msra.mxu0 0
        %613 = vmatprep.subr.bf16.mxu0 0
        %614 = vmatpush1.bf16.msra.mxu0 0
        %615 = vmatprep.subr.bf16.mxu0 0
        %616 = vmatpush1.bf16.msra.mxu0 0
        %617 = vmatprep.subr.bf16.mxu0 0
        %618 = vmatpush1.bf16.msra.mxu0 0
        %619 = vmatprep.subr.bf16.mxu0 0
        %620 = vmatpush1.bf16.msra.mxu0 0
        %621 = vmatprep.subr.bf16.mxu0 0
        %622 = vmatpush1.bf16.msra.mxu0 0
        %623 = vmatprep.subr.bf16.mxu0 0
        %624 = vmatpush1.bf16.msra.mxu0 0
        %625 = vmatprep.subr.bf16.mxu0 0
        %626 = vmatpush1.bf16.msra.mxu0 0
        %627 = vmatprep.mubr.bf16.mxu0 0
        %628 = vmatmul.mubr.bf16.gmra.mrb[0].mxu0 %v593
        %v629 = vpop.f32.mrb[0].mxu0
        %v630 = vadd.f32 %v476, %v629
        %v631 = vpop.f32.mrb[0].mxu0
        %v632 = vpop.f32.mrb[0].mxu0
        %v633 = vadd.f32 %v479, %v632
        %v634 = vpop.f32.mrb[0].mxu0
        %635 = vmatprep.mubr.bf16.mxu0 0
        %636 = vmatmul.mubr.bf16.gmra.mrb[0].mxu0 %v400
        %v637 = vpop.f32.mrb[0].mxu0
        %v638 = vadd.f32 %v484, %v637
        %v639 = vpop.f32.mrb[0].mxu0
        %v640 = vpop.f32.mrb[0].mxu0
        %v641 = vadd.f32 %v487, %v640
        %v642 = vpop.f32.mrb[0].mxu0
        %643 = vmatprep.mubr.bf16.mxu0 0
        %644 = vmatmul.mubr.bf16.gmra.mrb[0].mxu0 %v403
        %v645 = vpop.f32.mrb[0].mxu0
        %v646 = vadd.f32 %v492, %v645
        %v647 = vpop.f32.mrb[0].mxu0
        %v648 = vpop.f32.mrb[0].mxu0
        %v649 = vadd.f32 %v495, %v648
        %v650 = vpop.f32.mrb[0].mxu0
        %651 = vmatprep.mubr.bf16.mxu0 0
        %652 = vmatmul.mubr.bf16.gmra.mrb[0].mxu0 %v406
        %v653 = vpop.f32.mrb[0].mxu0
        %v654 = vadd.f32 %v500, %v653
        %v655 = vpop.f32.mrb[0].mxu0
        %v656 = vpop.f32.mrb[0].mxu0
        %v657 = vadd.f32 %v503, %v656
        %v658 = vpop.f32.mrb[0].mxu0
        %659 = vmatprep.mubr.bf16.mxu0 0
        %660 = vmatmul.mubr.bf16.gmra.mrb[0].mxu0 %v409
        %v661 = vpop.f32.mrb[0].mxu0
        %v662 = vadd.f32 %v508, %v661
        %v663 = vpop.f32.mrb[0].mxu0
        %v664 = vpop.f32.mrb[0].mxu0
        %v665 = vadd.f32 %v511, %v664
        %v666 = vpop.f32.mrb[0].mxu0
        %667 = vmatprep.mubr.bf16.mxu0 0
        %668 = vmatmul.mubr.bf16.gmra.mrb[0].mxu0 %v412
        %v669 = vpop.f32.mrb[0].mxu0
        %v670 = vadd.f32 %v516, %v669
        %v671 = vpop.f32.mrb[0].mxu0
        %v672 = vpop.f32.mrb[0].mxu0
        %v673 = vadd.f32 %v519, %v672
        %v674 = vpop.f32.mrb[0].mxu0
        %675 = vmatprep.mubr.bf16.mxu0 0
        %676 = vmatmul.mubr.bf16.gmra.mrb[0].mxu0 %v415
        %v677 = vpop.f32.mrb[0].mxu0
        %v678 = vadd.f32 %v524, %v677
        %v679 = vpop.f32.mrb[0].mxu0
        %v680 = vpop.f32.mrb[0].mxu0
        %v681 = vadd.f32 %v527, %v680
        %v682 = vpop.f32.mrb[0].mxu0
        %683 = vmatprep.mubr.bf16.mxu0 0
        %684 = vmatmul.mubr.bf16.gmra.mrb[0].mxu0 %v418
        %v685 = vpop.f32.mrb[0].mxu0
        %v686 = vadd.f32 %v532, %v685
        %v687 = vpop.f32.mrb[0].mxu0
        %v688 = vpop.f32.mrb[0].mxu0
        %v689 = vadd.f32 %v535, %v688
        %v690 = vpop.f32.mrb[0].mxu0
        %691 = vmatprep.mubr.bf16.mxu0 0
        %692 = vmatmul.mubr.bf16.gmra.mrb[0].mxu0 %v421
        %v693 = vpop.f32.mrb[0].mxu0
        %v694 = vadd.f32 %v540, %v693
        %v695 = vpop.f32.mrb[0].mxu0
        %v696 = vpop.f32.mrb[0].mxu0
        %v697 = vadd.f32 %v543, %v696
        %v698 = vpop.f32.mrb[0].mxu0
        %699 = vmatprep.mubr.bf16.mxu0 0
        %700 = vmatmul.mubr.bf16.gmra.mrb[0].mxu0 %v424
        %v701 = vpop.f32.mrb[0].mxu0
        %v702 = vadd.f32 %v548, %v701
        %v703 = vpop.f32.mrb[0].mxu0
        %v704 = vpop.f32.mrb[0].mxu0
        %v705 = vadd.f32 %v551, %v704
        %v706 = vpop.f32.mrb[0].mxu0
        %707 = vmatprep.mubr.bf16.mxu0 0
        %708 = vmatmul.mubr.bf16.gmra.mrb[0].mxu0 %v427
        %v709 = vpop.f32.mrb[0].mxu0
        %v710 = vadd.f32 %v556, %v709
        %v711 = vpop.f32.mrb[0].mxu0
        %v712 = vpop.f32.mrb[0].mxu0
        %v713 = vadd.f32 %v559, %v712
        %v714 = vpop.f32.mrb[0].mxu0
        %715 = vmatprep.mubr.bf16.mxu0 0
        %716 = vmatmul.mubr.bf16.gmra.mrb[0].mxu0 %v430
        %v717 = vpop.f32.mrb[0].mxu0
        %v718 = vadd.f32 %v564, %v717
        %v719 = vpop.f32.mrb[0].mxu0
        %v720 = vpop.f32.mrb[0].mxu0
        %v721 = vadd.f32 %v567, %v720
        %v722 = vpop.f32.mrb[0].mxu0
        %723 = vmatprep.mubr.bf16.mxu0 0
        %724 = vmatmul.mubr.bf16.gmra.mrb[0].mxu0 %v433
        %v725 = vpop.f32.mrb[0].mxu0
        %v726 = vadd.f32 %v572, %v725
        %v727 = vpop.f32.mrb[0].mxu0
        %v728 = vpop.f32.mrb[0].mxu0
        %v729 = vadd.f32 %v575, %v728
        %v730 = vpop.f32.mrb[0].mxu0
        %731 = vmatprep.mubr.bf16.mxu0 0
        %732 = vmatmul.mubr.bf16.gmra.mrb[0].mxu0 %v436
        %v733 = vpop.f32.mrb[0].mxu0
        %v734 = vadd.f32 %v580, %v733
        %v735 = vpop.f32.mrb[0].mxu0
        %v736 = vpop.f32.mrb[0].mxu0
        %v737 = vadd.f32 %v583, %v736
        %v738 = vpop.f32.mrb[0].mxu0
        %739 = vdwg.mxu0
        %s740 = scalar_lea.vmem %s2, 16
        %v741 = vld [vmem:[%s740] sm:$0xf]
        %v742 = vld [vmem:[%s740 + $0x4] sm:$0xf]
        %v745 = vunpack.c.l.b16 %v741
        %v746 = vunpack.c.l.b16 %v742
        %v747 = vpack.c.b16 %v746, %v745
        %v750 = vsel %vm398, %v386, 0
        %752 = vmatprep.subr.bf16.mxu0 0
        %753 = vmatpush1.bf16.msra.mxu0 %v747
        %754 = vmatprep.subr.bf16.mxu0 0
        %755 = vmatpush1.bf16.msra.mxu0 0
        %756 = vmatprep.subr.bf16.mxu0 0
        %757 = vmatpush1.bf16.msra.mxu0 0
        %758 = vmatprep.subr.bf16.mxu0 0
        %759 = vmatpush1.bf16.msra.mxu0 0
        %760 = vmatprep.subr.bf16.mxu0 0
        %761 = vmatpush1.bf16.msra.mxu0 0
        %762 = vmatprep.subr.bf16.mxu0 0
        %763 = vmatpush1.bf16.msra.mxu0 0
        %764 = vmatprep.subr.bf16.mxu0 0
        %765 = vmatpush1.bf16.msra.mxu0 0
        %766 = vmatprep.subr.bf16.mxu0 0
        %767 = vmatpush1.bf16.msra.mxu0 0
        %768 = vmatprep.subr.bf16.mxu0 0
        %769 = vmatpush1.bf16.msra.mxu0 0
        %770 = vmatprep.subr.bf16.mxu0 0
        %771 = vmatpush1.bf16.msra.mxu0 0
        %772 = vmatprep.subr.bf16.mxu0 0
        %773 = vmatpush1.bf16.msra.mxu0 0
        %774 = vmatprep.subr.bf16.mxu0 0
        %775 = vmatpush1.bf16.msra.mxu0 0
        %776 = vmatprep.subr.bf16.mxu0 0
        %777 = vmatpush1.bf16.msra.mxu0 0
        %778 = vmatprep.subr.bf16.mxu0 0
        %779 = vmatpush1.bf16.msra.mxu0 0
        %780 = vmatprep.subr.bf16.mxu0 0
        %781 = vmatpush1.bf16.msra.mxu0 0
        %782 = vmatprep.subr.bf16.mxu0 0
        %783 = vmatpush1.bf16.msra.mxu0 0
        %784 = vmatprep.mubr.bf16.mxu0 0
        %785 = vmatmul.mubr.bf16.gmra.mrb[0].mxu0 %v403
        %v786 = vpop.f32.mrb[0].mxu0
        %v787 = vadd.f32 0.0, %v786
        %v788 = vpop.f32.mrb[0].mxu0
        %v789 = vpop.f32.mrb[0].mxu0
        %v790 = vadd.f32 0.0, %v789
        %v791 = vpop.f32.mrb[0].mxu0
        %792 = vmatprep.mubr.bf16.mxu0 0
        %793 = vmatmul.mubr.bf16.gmra.mrb[0].mxu0 %v406
        %v794 = vpop.f32.mrb[0].mxu0
        %v795 = vadd.f32 0.0, %v794
        %v796 = vpop.f32.mrb[0].mxu0
        %v797 = vpop.f32.mrb[0].mxu0
        %v798 = vadd.f32 0.0, %v797
        %v799 = vpop.f32.mrb[0].mxu0
        %800 = vmatprep.mubr.bf16.mxu0 0
        %801 = vmatmul.mubr.bf16.gmra.mrb[0].mxu0 %v409
        %v802 = vpop.f32.mrb[0].mxu0
        %v803 = vadd.f32 0.0, %v802
        %v804 = vpop.f32.mrb[0].mxu0
        %v805 = vpop.f32.mrb[0].mxu0
        %v806 = vadd.f32 0.0, %v805
        %v807 = vpop.f32.mrb[0].mxu0
        %808 = vmatprep.mubr.bf16.mxu0 0
        %809 = vmatmul.mubr.bf16.gmra.mrb[0].mxu0 %v412
        %v810 = vpop.f32.mrb[0].mxu0
        %v811 = vadd.f32 0.0, %v810
        %v812 = vpop.f32.mrb[0].mxu0
        %v813 = vpop.f32.mrb[0].mxu0
        %v814 = vadd.f32 0.0, %v813
        %v815 = vpop.f32.mrb[0].mxu0
        %816 = vmatprep.mubr.bf16.mxu0 0
        %817 = vmatmul.mubr.bf16.gmra.mrb[0].mxu0 %v415
        %v818 = vpop.f32.mrb[0].mxu0
        %v819 = vadd.f32 0.0, %v818
        %v820 = vpop.f32.mrb[0].mxu0
        %v821 = vpop.f32.mrb[0].mxu0
        %v822 = vadd.f32 0.0, %v821
        %v823 = vpop.f32.mrb[0].mxu0
        %824 = vmatprep.mubr.bf16.mxu0 0
        %825 = vmatmul.mubr.bf16.gmra.mrb[0].mxu0 %v418
        %v826 = vpop.f32.mrb[0].mxu0
        %v827 = vadd.f32 0.0, %v826
        %v828 = vpop.f32.mrb[0].mxu0
        %v829 = vpop.f32.mrb[0].mxu0
        %v830 = vadd.f32 0.0, %v829
        %v831 = vpop.f32.mrb[0].mxu0
        %832 = vmatprep.mubr.bf16.mxu0 0
        %833 = vmatmul.mubr.bf16.gmra.mrb[0].mxu0 %v421
        %v834 = vpop.f32.mrb[0].mxu0
        %v835 = vadd.f32 0.0, %v834
        %v836 = vpop.f32.mrb[0].mxu0
        %v837 = vpop.f32.mrb[0].mxu0
        %v838 = vadd.f32 0.0, %v837
        %v839 = vpop.f32.mrb[0].mxu0
        %840 = vmatprep.mubr.bf16.mxu0 0
        %841 = vmatmul.mubr.bf16.gmra.mrb[0].mxu0 %v424
        %v842 = vpop.f32.mrb[0].mxu0
        %v843 = vadd.f32 0.0, %v842
        %v844 = vpop.f32.mrb[0].mxu0
        %v845 = vpop.f32.mrb[0].mxu0
        %v846 = vadd.f32 0.0, %v845
        %v847 = vpop.f32.mrb[0].mxu0
        %848 = vmatprep.mubr.bf16.mxu0 0
        %849 = vmatmul.mubr.bf16.gmra.mrb[0].mxu0 %v427
        %v850 = vpop.f32.mrb[0].mxu0
        %v851 = vadd.f32 0.0, %v850
        %v852 = vpop.f32.mrb[0].mxu0
        %v853 = vpop.f32.mrb[0].mxu0
        %v854 = vadd.f32 0.0, %v853
        %v855 = vpop.f32.mrb[0].mxu0
        %856 = vmatprep.mubr.bf16.mxu0 0
        %857 = vmatmul.mubr.bf16.gmra.mrb[0].mxu0 %v430
        %v858 = vpop.f32.mrb[0].mxu0
        %v859 = vadd.f32 0.0, %v858
        %v860 = vpop.f32.mrb[0].mxu0
        %v861 = vpop.f32.mrb[0].mxu0
        %v862 = vadd.f32 0.0, %v861
        %v863 = vpop.f32.mrb[0].mxu0
        %864 = vmatprep.mubr.bf16.mxu0 0
        %865 = vmatmul.mubr.bf16.gmra.mrb[0].mxu0 %v433
        %v866 = vpop.f32.mrb[0].mxu0
        %v867 = vadd.f32 0.0, %v866
        %v868 = vpop.f32.mrb[0].mxu0
        %v869 = vpop.f32.mrb[0].mxu0
        %v870 = vadd.f32 0.0, %v869
        %v871 = vpop.f32.mrb[0].mxu0
        %872 = vmatprep.mubr.bf16.mxu0 0
        %873 = vmatmul.mubr.bf16.gmra.mrb[0].mxu0 %v436
        %v874 = vpop.f32.mrb[0].mxu0
        %v875 = vadd.f32 0.0, %v874
        %v876 = vpop.f32.mrb[0].mxu0
        %v877 = vpop.f32.mrb[0].mxu0
        %v878 = vadd.f32 0.0, %v877
        %v879 = vpop.f32.mrb[0].mxu0
        %880 = vmatprep.mubr.bf16.mxu0 0
        %881 = vmatmul.mubr.bf16.gmra.mrb[0].mxu0 %v439
        %v882 = vpop.f32.mrb[0].mxu0
        %v883 = vadd.f32 0.0, %v882
        %v884 = vpop.f32.mrb[0].mxu0
        %v885 = vpop.f32.mrb[0].mxu0
        %v886 = vadd.f32 0.0, %v885
        %v887 = vpop.f32.mrb[0].mxu0
        %888 = vmatprep.mubr.bf16.mxu0 0
        %889 = vmatmul.mubr.bf16.gmra.mrb[0].mxu0 %v750
        %v890 = vpop.f32.mrb[0].mxu0
        %v891 = vadd.f32 0.0, %v890
        %v892 = vpop.f32.mrb[0].mxu0
        %v893 = vpop.f32.mrb[0].mxu0
        %v894 = vadd.f32 0.0, %v893
        %v895 = vpop.f32.mrb[0].mxu0
        %896 = vdwg.mxu0
        %v897 = vadd.f32 %v630, %v787
        %v898 = vadd.f32 %v633, %v790
        %v899 = vadd.f32 %v638, %v795
        %v900 = vadd.f32 %v641, %v798
        %v901 = vadd.f32 %v646, %v803
        %v902 = vadd.f32 %v649, %v806
        %v903 = vadd.f32 %v654, %v811
        %v904 = vadd.f32 %v657, %v814
        %v905 = vadd.f32 %v662, %v819
        %v906 = vadd.f32 %v665, %v822
        %v907 = vadd.f32 %v670, %v827
        %v908 = vadd.f32 %v673, %v830
        %v909 = vadd.f32 %v678, %v835
        %v910 = vadd.f32 %v681, %v838
        %v911 = vadd.f32 %v686, %v843
        %v912 = vadd.f32 %v689, %v846
        %v913 = vadd.f32 %v694, %v851
        %v914 = vadd.f32 %v697, %v854
        %v915 = vadd.f32 %v702, %v859
        %v916 = vadd.f32 %v705, %v862
        %v917 = vadd.f32 %v710, %v867
        %v918 = vadd.f32 %v713, %v870
        %v919 = vadd.f32 %v718, %v875
        %v920 = vadd.f32 %v721, %v878
        %v921 = vadd.f32 %v726, %v883
        %v922 = vadd.f32 %v729, %v886
        %v923 = vadd.f32 %v734, %v891
        %v924 = vadd.f32 %v737, %v894
        %v925 = vld [vmem:[%s330] sm:$0xff]
        %v926 = vld [vmem:[%s330 + $0x8] sm:$0xff]
        %v927 = vld [vmem:[%s330 + $0x10] sm:$0xff]
        %v928 = vld [vmem:[%s330 + $0x18] sm:$0xff]
        %v929 = vld [vmem:[%s330 + $0x20] sm:$0xff]
        %v930 = vld [vmem:[%s330 + $0x28] sm:$0xff]
        %v931 = vld [vmem:[%s330 + $0x30] sm:$0xff]
        %v932 = vld [vmem:[%s330 + $0x38] sm:$0xff]
        %v933 = vld [vmem:[%s330 + $0x40] sm:$0xff]
        %v934 = vld [vmem:[%s330 + $0x48] sm:$0xff]
        %v935 = vld [vmem:[%s330 + $0x50] sm:$0xff]
        %v936 = vld [vmem:[%s330 + $0x58] sm:$0xff]
        %v937 = vld [vmem:[%s330 + $0x60] sm:$0xff]
        %v938 = vld [vmem:[%s330 + $0x68] sm:$0xff]
        %v939 = vld [vmem:[%s330 + $0x70] sm:$0xff]
        %v940 = vld [vmem:[%s330 + $0x78] sm:$0xff]
        %v941 = vld [vmem:[%s330 + $0x80] sm:$0xff]
        %v942 = vld [vmem:[%s330 + $0x88] sm:$0xff]
        %v943 = vld [vmem:[%s330 + $0x90] sm:$0xff]
        %v944 = vld [vmem:[%s330 + $0x98] sm:$0xff]
        %v945 = vld [vmem:[%s330 + $0xa0] sm:$0xff]
        %v946 = vld [vmem:[%s330 + $0xa8] sm:$0xff]
        %v947 = vld [vmem:[%s330 + $0xb0] sm:$0xff]
        %v948 = vld [vmem:[%s330 + $0xb8] sm:$0xff]
        %v949 = vld [vmem:[%s330 + $0xc0] sm:$0xff]
        %v950 = vld [vmem:[%s330 + $0xc8] sm:$0xff]
        %v951 = vld [vmem:[%s330 + $0xd0] sm:$0xff]
        %v952 = vld [vmem:[%s330 + $0xd8] sm:$0xff]
        %954 = vset.pattern.permute.xlu0 0
        %955 = vperm.xlu0 %954, %v925
        %v956 = vpop.permute.xlu0 %955
        %959 = vset.pattern.permute.xlu0 0
        %960 = vperm.xlu0 %959, %v926
        %v961 = vpop.permute.xlu0 %960
        %964 = vset.pattern.permute.xlu0 0
        %965 = vperm.xlu0 %964, %v927
        %v966 = vpop.permute.xlu0 %965
        %969 = vset.pattern.permute.xlu0 0
        %970 = vperm.xlu0 %969, %v928
        %v971 = vpop.permute.xlu0 %970
        %974 = vset.pattern.permute.xlu0 0
        %975 = vperm.xlu0 %974, %v929
        %v976 = vpop.permute.xlu0 %975
        %979 = vset.pattern.permute.xlu0 0
        %980 = vperm.xlu0 %979, %v930
        %v981 = vpop.permute.xlu0 %980
        %984 = vset.pattern.permute.xlu0 0
        %985 = vperm.xlu0 %984, %v931
        %v986 = vpop.permute.xlu0 %985
        %989 = vset.pattern.permute.xlu0 0
        %990 = vperm.xlu0 %989, %v932
        %v991 = vpop.permute.xlu0 %990
        %994 = vset.pattern.permute.xlu0 0
        %995 = vperm.xlu0 %994, %v933
        %v996 = vpop.permute.xlu0 %995
        %999 = vset.pattern.permute.xlu0 0
        %1000 = vperm.xlu0 %999, %v934
        %v1001 = vpop.permute.xlu0 %1000
        %1004 = vset.pattern.permute.xlu0 0
        %1005 = vperm.xlu0 %1004, %v935
        %v1006 = vpop.permute.xlu0 %1005
        %1009 = vset.pattern.permute.xlu0 0
        %1010 = vperm.xlu0 %1009, %v936
        %v1011 = vpop.permute.xlu0 %1010
        %1014 = vset.pattern.permute.xlu0 0
        %1015 = vperm.xlu0 %1014, %v937
        %v1016 = vpop.permute.xlu0 %1015
        %1019 = vset.pattern.permute.xlu0 0
        %1020 = vperm.xlu0 %1019, %v938
        %v1021 = vpop.permute.xlu0 %1020
        %1024 = vset.pattern.permute.xlu0 0
        %1025 = vperm.xlu0 %1024, %v939
        %v1026 = vpop.permute.xlu0 %1025
        %1029 = vset.pattern.permute.xlu0 0
        %1030 = vperm.xlu0 %1029, %v940
        %v1031 = vpop.permute.xlu0 %1030
        %1034 = vset.pattern.permute.xlu0 0
        %1035 = vperm.xlu0 %1034, %v941
        %v1036 = vpop.permute.xlu0 %1035
        %1039 = vset.pattern.permute.xlu0 0
        %1040 = vperm.xlu0 %1039, %v942
        %v1041 = vpop.permute.xlu0 %1040
        %1044 = vset.pattern.permute.xlu0 0
        %1045 = vperm.xlu0 %1044, %v943
        %v1046 = vpop.permute.xlu0 %1045
        %1049 = vset.pattern.permute.xlu0 0
        %1050 = vperm.xlu0 %1049, %v944
        %v1051 = vpop.permute.xlu0 %1050
        %1054 = vset.pattern.permute.xlu0 0
        %1055 = vperm.xlu0 %1054, %v945
        %v1056 = vpop.permute.xlu0 %1055
        %1059 = vset.pattern.permute.xlu0 0
        %1060 = vperm.xlu0 %1059, %v946
        %v1061 = vpop.permute.xlu0 %1060
        %1064 = vset.pattern.permute.xlu0 0
        %1065 = vperm.xlu0 %1064, %v947
        %v1066 = vpop.permute.xlu0 %1065
        %1069 = vset.pattern.permute.xlu0 0
        %1070 = vperm.xlu0 %1069, %v948
        %v1071 = vpop.permute.xlu0 %1070
        %1074 = vset.pattern.permute.xlu0 0
        %1075 = vperm.xlu0 %1074, %v949
        %v1076 = vpop.permute.xlu0 %1075
        %1079 = vset.pattern.permute.xlu0 0
        %1080 = vperm.xlu0 %1079, %v950
        %v1081 = vpop.permute.xlu0 %1080
        %1084 = vset.pattern.permute.xlu0 0
        %1085 = vperm.xlu0 %1084, %v951
        %v1086 = vpop.permute.xlu0 %1085
        %1089 = vset.pattern.permute.xlu0 0
        %1090 = vperm.xlu0 %1089, %v952
        %v1091 = vpop.permute.xlu0 %1090
        %v1093 = vmul.f32 %v897, %v956
        %v1094 = vmul.f32 %v898, %v961
        %v1095 = vmul.f32 %v899, %v966
        %v1096 = vmul.f32 %v900, %v971
        %v1097 = vmul.f32 %v901, %v976
        %v1098 = vmul.f32 %v902, %v981
        %v1099 = vmul.f32 %v903, %v986
        %v1100 = vmul.f32 %v904, %v991
        %v1101 = vmul.f32 %v905, %v996
        %v1102 = vmul.f32 %v906, %v1001
        %v1103 = vmul.f32 %v907, %v1006
        %v1104 = vmul.f32 %v908, %v1011
        %v1105 = vmul.f32 %v909, %v1016
        %v1106 = vmul.f32 %v910, %v1021
        %v1107 = vmul.f32 %v911, %v1026
        %v1108 = vmul.f32 %v912, %v1031
        %v1109 = vmul.f32 %v913, %v1036
        %v1110 = vmul.f32 %v914, %v1041
        %v1111 = vmul.f32 %v915, %v1046
        %v1112 = vmul.f32 %v916, %v1051
        %v1113 = vmul.f32 %v917, %v1056
        %v1114 = vmul.f32 %v918, %v1061
        %v1115 = vmul.f32 %v919, %v1066
        %v1116 = vmul.f32 %v920, %v1071
        %v1117 = vmul.f32 %v921, %v1076
        %v1118 = vmul.f32 %v922, %v1081
        %v1119 = vmul.f32 %v923, %v1086
        %v1120 = vmul.f32 %v924, %v1091
        %v1121 = vld [vmem:[%s295] sm:$0x1]
        %v1122 = vadd.f32 %v1093, %v1094
        %v1123 = vadd.f32 %v1122, %v1095
        %v1124 = vadd.f32 %v1123, %v1096
        %v1125 = vadd.f32 %v1124, %v1097
        %v1126 = vadd.f32 %v1125, %v1098
        %v1127 = vadd.f32 %v1126, %v1099
        %v1128 = vadd.f32 %v1127, %v1100
        %v1129 = vadd.f32 %v1128, %v1101
        %v1130 = vadd.f32 %v1129, %v1102
        %v1131 = vadd.f32 %v1130, %v1103
        %v1132 = vadd.f32 %v1131, %v1104
        %v1133 = vadd.f32 %v1132, %v1105
        %v1134 = vadd.f32 %v1133, %v1106
        %v1135 = vadd.f32 %v1134, %v1107
        %v1136 = vadd.f32 %v1135, %v1108
        %v1137 = vadd.f32 %v1136, %v1109
        %v1138 = vadd.f32 %v1137, %v1110
        %v1139 = vadd.f32 %v1138, %v1111
        %v1140 = vadd.f32 %v1139, %v1112
        %v1141 = vadd.f32 %v1140, %v1113
        %v1142 = vadd.f32 %v1141, %v1114
        %v1143 = vadd.f32 %v1142, %v1115
        %v1144 = vadd.f32 %v1143, %v1116
        %v1145 = vadd.f32 %v1144, %v1117
        %v1146 = vadd.f32 %v1145, %v1118
        %v1147 = vadd.f32 %v1146, %v1119
        %v1148 = vadd.f32 %v1147, %v1120
        %v1149 = vrot.slane %v1148, 4
        %v1150 = vadd.f32 %v1148, %v1149
        %v1151 = vrot.slane %v1150, 2
        %v1152 = vadd.f32 %v1150, %v1151
        %v1153 = vrot.slane %v1152, 1
        %v1154 = vadd.f32 %v1152, %v1153
        %v1155 = vadd.f32 %v1121, %v1154
        %1156 = vst [vmem:[%s295] sm:$0x1] %v1155
        %v1157 = vld [vmem:[%s301] sm:$0x1]
        %v1158 = vmul.f32 %v1093, %v897
        %v1159 = vmul.f32 %v1094, %v898
        %v1160 = vmul.f32 %v1095, %v899
        %v1161 = vmul.f32 %v1096, %v900
        %v1162 = vmul.f32 %v1097, %v901
        %v1163 = vmul.f32 %v1098, %v902
        %v1164 = vmul.f32 %v1099, %v903
        %v1165 = vmul.f32 %v1100, %v904
        %v1166 = vmul.f32 %v1101, %v905
        %v1167 = vmul.f32 %v1102, %v906
        %v1168 = vmul.f32 %v1103, %v907
        %v1169 = vmul.f32 %v1104, %v908
        %v1170 = vmul.f32 %v1105, %v909
        %v1171 = vmul.f32 %v1106, %v910
        %v1172 = vmul.f32 %v1107, %v911
        %v1173 = vmul.f32 %v1108, %v912
        %v1174 = vmul.f32 %v1109, %v913
        %v1175 = vmul.f32 %v1110, %v914
        %v1176 = vmul.f32 %v1111, %v915
        %v1177 = vmul.f32 %v1112, %v916
        %v1178 = vmul.f32 %v1113, %v917
        %v1179 = vmul.f32 %v1114, %v918
        %v1180 = vmul.f32 %v1115, %v919
        %v1181 = vmul.f32 %v1116, %v920
        %v1182 = vmul.f32 %v1117, %v921
        %v1183 = vmul.f32 %v1118, %v922
        %v1184 = vmul.f32 %v1119, %v923
        %v1185 = vmul.f32 %v1120, %v924
        %v1186 = vadd.f32 %v1158, %v1159
        %v1187 = vadd.f32 %v1186, %v1160
        %v1188 = vadd.f32 %v1187, %v1161
        %v1189 = vadd.f32 %v1188, %v1162
        %v1190 = vadd.f32 %v1189, %v1163
        %v1191 = vadd.f32 %v1190, %v1164
        %v1192 = vadd.f32 %v1191, %v1165
        %v1193 = vadd.f32 %v1192, %v1166
        %v1194 = vadd.f32 %v1193, %v1167
        %v1195 = vadd.f32 %v1194, %v1168
        %v1196 = vadd.f32 %v1195, %v1169
        %v1197 = vadd.f32 %v1196, %v1170
        %v1198 = vadd.f32 %v1197, %v1171
        %v1199 = vadd.f32 %v1198, %v1172
        %v1200 = vadd.f32 %v1199, %v1173
        %v1201 = vadd.f32 %v1200, %v1174
        %v1202 = vadd.f32 %v1201, %v1175
        %v1203 = vadd.f32 %v1202, %v1176
        %v1204 = vadd.f32 %v1203, %v1177
        %v1205 = vadd.f32 %v1204, %v1178
        %v1206 = vadd.f32 %v1205, %v1179
        %v1207 = vadd.f32 %v1206, %v1180
        %v1208 = vadd.f32 %v1207, %v1181
        %v1209 = vadd.f32 %v1208, %v1182
        %v1210 = vadd.f32 %v1209, %v1183
        %v1211 = vadd.f32 %v1210, %v1184
        %v1212 = vadd.f32 %v1211, %v1185
        %v1213 = vrot.slane %v1212, 4
        %v1214 = vadd.f32 %v1212, %v1213
        %v1215 = vrot.slane %v1214, 2
        %v1216 = vadd.f32 %v1214, %v1215
        %v1217 = vrot.slane %v1216, 1
        %v1218 = vadd.f32 %v1216, %v1217
        %v1219 = vadd.f32 %v1157, %v1218
        %1220 = vst [vmem:[%s301] sm:$0x1] %v1219
        %s1221 = sand.u32 %s150, 1
        %s1222 = scalar_lea.sflag [#allocation3], %s1221
        %s1223 = sand.u32 %s150, 1
        %s1224 = scalar_lea.vmem [#allocation2], %s1223
        %s1225 = sand.u32 %s176, 1
        %s1226 = scalar_lea.sflag [#allocation5], %s1225
        %s1227 = sand.u32 %s176, 1
        %s1228 = scalar_lea.vmem [#allocation4], %s1227
        // Predicated region
        $region41: #{tpu_custom_call.1} parent=35 // pred_check
          %p1229 = pneg %p160
        $region42: #{tpu_custom_call.1} parent=35 // pred_check_branch
          %1231 = sbr.rel (%p1229) target = $region44
        $region43: #{tpu_custom_call.1} parent=35 // pred_region
          %s1233 = ssub.s32 16, 16
          %1234 = vsyncadd %s1222, %s1233
          %s1235 = smul.addr %s27, 16
          %s1236 = scalar_lea.hbm %s4, %s1235
          %s1238 = sshll.u32 %s1224, 4
          %s1239 = int_to_ptr.vmem [resolvable:$true] %s1238
          %1241 = dma.vmem_to_hbm [thread:$0]  %s1239, 16, %s1236, %s1222
        $region44: #{tpu_custom_call.1} parent=35 // pred_fallthru
          _
        // Predicated region
        $region45: #{tpu_custom_call.1} parent=35 // pred_check
          %p1242 = pneg %p186
        $region46: #{tpu_custom_call.1} parent=35 // pred_check_branch
          %1244 = sbr.rel (%p1242) target = $region48
        $region47: #{tpu_custom_call.1} parent=35 // pred_region
          %s1246 = ssub.s32 16, 16
          %1247 = vsyncadd %s1226, %s1246
          %s1248 = smul.addr %s27, 16
          %s1249 = scalar_lea.hbm %s5, %s1248
          %s1251 = sshll.u32 %s1228, 4
          %s1252 = int_to_ptr.vmem [resolvable:$true] %s1251
          %1254 = dma.vmem_to_hbm [thread:$0]  %s1252, 16, %s1249, %s1226
        $region48: #{tpu_custom_call.1} parent=35 // pred_fallthru
          _
      $region36: #{tpu_custom_call.1} parent=5 // pred_fallthru
        _
      %p1255 = scmp.le.s32.totalorder 2, %s18
      // Predicated region
      $region49: #{tpu_custom_call.1} parent=5 // pred_check
        %p1256 = pneg %p1255
      $region50: #{tpu_custom_call.1} parent=5 // pred_check_branch
        %1258 = sbr.rel (%p1256) target = $region52
      $region51: #{tpu_custom_call.1} parent=5 // pred_region
        %s1259 = ssub.s32 %s18, 2
        // Predicated region
        $region53: #{tpu_custom_call.1} parent=51 // pred_check
          %p1260 = pneg %p166
        $region54: #{tpu_custom_call.1} parent=51 // pred_check_branch
          %1262 = sbr.rel (%p1260) target = $region56
        $region55: #{tpu_custom_call.1} parent=51 // pred_region
          %s1263 = sand.u32 %s151, 1
          %s1264 = scalar_lea.sflag [#allocation3], %s1263
          %s1265 = sand.u32 %s151, 1
          %s1266 = scalar_lea.vmem [#allocation2], %s1265
          %1267 = dma.done %s1264, 16
        $region56: #{tpu_custom_call.1} parent=51 // pred_fallthru
          _
        // Predicated region
        $region57: #{tpu_custom_call.1} parent=51 // pred_check
          %p1268 = pneg %p192
        $region58: #{tpu_custom_call.1} parent=51 // pred_check_branch
          %1270 = sbr.rel (%p1268) target = $region60
        $region59: #{tpu_custom_call.1} parent=51 // pred_region
          %s1271 = sand.u32 %s177, 1
          %s1272 = scalar_lea.sflag [#allocation5], %s1271
          %s1273 = sand.u32 %s177, 1
          %s1274 = scalar_lea.vmem [#allocation4], %s1273
          %1275 = dma.done %s1272, 16
        $region60: #{tpu_custom_call.1} parent=51 // pred_fallthru
          _
      $region52: #{tpu_custom_call.1} parent=5 // pred_fallthru
        _
    $region6: #{tpu_custom_call.1} parent=1 // loop_footer
      %s22 = sadd.s32 1, %s18
    $region7: #{tpu_custom_call.1} parent=1 // loop_footer_branch
      %17 = sbr.rel target = $region3
    $region8: #{tpu_custom_call.1} parent=1 // loop_exit
      _
    %1276 = vsyncpa [#allocation3], 1
    %s1277 = scalar_lea.sflag [#allocation3], 1
    %1278 = vsyncpa %s1277, 1
    %1279 = vsyncpa [#allocation5], 1
    %s1280 = scalar_lea.sflag [#allocation5], 1
    %1281 = vsyncpa %s1280, 1

</llo_original>
